<compile_context>
chip_gen: v5e
topology: v5e:2x2
jax: 0.10.0
libtpu: 0.0.40
codegen_flags: <defaults>
</compile_context>

<pallas_src>
import functools

import jax
import jax.numpy as jnp
from jax.experimental import pallas as pl
from jax.experimental.pallas import tpu as pltpu


LANE = 128        # TPU lane width (last dim granule)
SUBLANE_BF16 = 16 # bf16 vreg holds [16, 128]; pad M to 16 so M-axis vregs are full
MAX_TM = 256
MAX_TK = 512
VMEM_BUDGET = 32 << 20   # target working set (fits v7x's 32 MiB scoped default)


def _round_up(n, m):
    return ((n + m - 1) // m) * m


def _vmem_bytes(tm, tk, e_pad, n_pad):
    """Double-buffered input/output blocks + accumulator scratch, in bytes."""
    bf16, f32 = 2, 4
    inputs = 2 * (tm * tk * bf16          # x block
                  + tk * e_pad * bf16     # backbone weight block
                  + e_pad * f32           # backbone bias (whole)
                  + e_pad * n_pad * bf16  # all heads (whole)
                  + n_pad * f32)          # head bias (whole)
    output = 2 * (tm * n_pad * f32)
    scratch = tm * e_pad * f32
    return inputs + output + scratch


def _pick_tiles(b_pad, d_in_pad, e_pad, n_pad):
    """Largest legal tiles under the VMEM budget (biggest tile = biggest lever)."""
    tm = min(b_pad, MAX_TM)
    tk = min(d_in_pad, MAX_TK)
    while _vmem_bytes(tm, tk, e_pad, n_pad) > VMEM_BUDGET and tk > LANE:
        tk //= 2
    while _vmem_bytes(tm, tk, e_pad, n_pad) > VMEM_BUDGET and tm > SUBLANE_BF16:
        tm //= 2
    return tm, tk


# ----------------------------------------------------------------------------- kernel
def _fused_backbone_heads_kernel(x_ref, bbw_ref, bbb_ref, hw_ref, hb_ref, o_ref,
                                 acc_ref):
    """o = gelu(x @ bbw + bbb) @ hw + hb, K-tiled over d_in.

    Grid: (M_tiles, K_tiles).  Per-step blocks:
      x   : (tm, tk)        bf16
      bbw : (tk, E_pad)     bf16
      bbb : (1, E_pad)      f32   (constant block; only touched in finalize)
      hw  : (E_pad, N_pad)  bf16  (constant block; all heads concatenated)
      hb  : (1, N_pad)      f32
      o   : (tm, N_pad)     f32   (constant along K -> accumulator-style revisit)
      acc : (tm, E_pad)     f32   VMEM scratch, persists across the K axis
    """
    k = pl.program_id(1)

    @pl.when(k == 0)
    def _init():
        acc_ref[...] = jnp.zeros_like(acc_ref)

    # Backbone matmul partial sum on the MXU, f32 accumulation.
    acc_ref[...] += jnp.dot(x_ref[...], bbw_ref[...],
                            preferred_element_type=jnp.float32)

    @pl.when(k == pl.num_programs(1) - 1)
    def _finalize():
        # Bias + GELU epilogue in f32 (VPU/EUP), only once per M tile.
        # TODO(synk): PyTorch nn.GELU defaults to the exact erf form; the tanh
        # approximation is used here (the real backbone is an injected transformer,
        # this linear+GELU is only a stand-in).
        feat = jax.nn.gelu(acc_ref[...] + bbb_ref[...], approximate=True)
        # Classifier heads: features never leave VMEM; cast to bf16 only for the MXU.
        out = jnp.dot(feat.astype(hw_ref.dtype), hw_ref[...],
                      preferred_element_type=jnp.float32)
        o_ref[...] = (out + hb_ref[...]).astype(o_ref.dtype)


def _fused_call(x_pad, bb_w, bb_b, head_w, head_b, *, tm, tk, vmem_limit):
    b_pad, d_in_pad = x_pad.shape
    e_pad = bb_w.shape[1]
    n_pad = head_w.shape[1]
    grid = (b_pad // tm, d_in_pad // tk)
    # TODO(synk): if E_pad / N_pad ever grow past a few thousand (many tasks or a
    # very wide backbone), add N/E grid axes as well; on v6e/v7x also round E/N
    # tiles to 256 to fill the 2x256^2 MXU.
    return pl.pallas_call(
        _fused_backbone_heads_kernel,
        out_shape=jax.ShapeDtypeStruct((b_pad, n_pad), jnp.float32),
        grid_spec=pltpu.PrefetchScalarGridSpec(
            num_scalar_prefetch=0,
            grid=grid,
            in_specs=[
                pl.BlockSpec((tm, tk), lambda i, k: (i, k)),        # x
                pl.BlockSpec((tk, e_pad), lambda i, k: (k, 0)),     # backbone W
                pl.BlockSpec((1, e_pad), lambda i, k: (0, 0)),      # backbone b
                pl.BlockSpec((e_pad, n_pad), lambda i, k: (0, 0)),  # all heads W
                pl.BlockSpec((1, n_pad), lambda i, k: (0, 0)),      # all heads b
            ],
            out_specs=pl.BlockSpec((tm, n_pad), lambda i, k: (i, 0)),
            scratch_shapes=[pltpu.VMEM((tm, e_pad), jnp.float32)],
        ),
        compiler_params=pltpu.CompilerParams(
            dimension_semantics=("parallel", "arbitrary"),
            vmem_limit_bytes=vmem_limit,
        ),
    )(x_pad, bb_w, bb_b, head_w, head_b)


@functools.partial(jax.jit,
                   static_argnames=("b_pad", "d_in_pad", "tm", "tk", "vmem_limit"))
def _padded_forward(x_flat_bf16, bb_w, bb_b, head_w, head_b, *,
                    b_pad, d_in_pad, tm, tk, vmem_limit):
    """Pad (in bf16) + fused kernel, jitted together so the pad is not a standalone
    eager f32 round-trip."""
    B, d_in = x_flat_bf16.shape
    x_pad = jnp.zeros((b_pad, d_in_pad), jnp.bfloat16).at[:B, :d_in].set(x_flat_bf16)
    return _fused_call(x_pad, bb_w, bb_b, head_w, head_b,
                       tm=tm, tk=tk, vmem_limit=vmem_limit)


# ----------------------------------------------------------------------------- module
class SiNetPallas:
    """JAX/Pallas re-implementation of SiNet's forward pass."""

    def __init__(self, *, in_chw, embd_dim, init_cls_num, inc_cls_num, task_num, key):
        self._cur_task_id = -1
        self.embd_dim = embd_dim
        self.init_cls_num = init_cls_num
        self.inc_cls_num = inc_cls_num
        self.task_num = task_num

        c, h, w = in_chw
        d_in = c * h * w
        self.d_in = d_in
        self.e_pad = _round_up(embd_dim, LANE)

        head_sizes = [init_cls_num] + [inc_cls_num] * (task_num - 1)
        self.head_sizes = head_sizes
        cum = [0]
        for n in head_sizes:
            cum.append(cum[-1] + n)
        self.cum_cls = cum                      # head i occupies columns [cum[i], cum[i+1])
        self.total_cls = cum[-1]
        self.n_pad = _round_up(self.total_cls, LANE)

        # K padding: round to 128, then (if tiled) to a multiple of the K tile so the
        # grid divides exactly.  Zero K-padding contributes 0 to the matmul.
        d_in_pad = _round_up(d_in, LANE)
        self.tk = min(d_in_pad, MAX_TK)
        self.d_in_pad = _round_up(d_in_pad, self.tk)

        k_bb_w, k_bb_b, k_heads = jax.random.split(key, 3)

        # --- synthetic backbone parameters (stand-in for the injected ViT backbone).
        # TODO(synk): the real backbone is an external transformer with LoRA experts
        # selected by expert_id; here it is a deterministic linear+GELU stand-in.
        bb_w = jax.random.normal(k_bb_w, (d_in, embd_dim), jnp.float32) / jnp.sqrt(d_in)
        bb_b = jax.random.normal(k_bb_b, (embd_dim,), jnp.float32) * 0.01
        self.bb_w_f32 = bb_w
        self.bb_b_f32 = bb_b

        # --- classifier pool: Linear(embd_dim, init_cls) + (task_num-1) x
        #     Linear(embd_dim, inc_cls).  Stored pre-transposed as (embd_dim, n_cls).
        bound = 1.0 / jnp.sqrt(embd_dim)        # nn.Linear default uniform init range
        head_ws, head_bs = [], []
        hk = k_heads
        for n_cls in head_sizes:
            hk, kw, kb = jax.random.split(hk, 3)
            head_ws.append(
                jax.random.uniform(kw, (embd_dim, n_cls), jnp.float32, -bound, bound)
            )
            head_bs.append(
                jax.random.uniform(kb, (n_cls,), jnp.float32, -bound, bound)
            )
        self.head_ws_f32 = head_ws
        self.head_bs_f32 = head_bs

        # --- padded + concatenated device buffers, built ONCE (not per forward).
        # Zero padding on K (d_in), feature (embd_dim) and class axes contributes
        # exactly 0 to the sliced logits (padded backbone bias is 0 -> gelu(0) = 0).
        bb_w_pad = jnp.zeros((self.d_in_pad, self.e_pad), jnp.float32)
        bb_w_pad = bb_w_pad.at[:d_in, :embd_dim].set(bb_w)
        bb_b_pad = jnp.zeros((1, self.e_pad), jnp.float32)
        bb_b_pad = bb_b_pad.at[0, :embd_dim].set(bb_b)

        w_cat = jnp.concatenate(head_ws, axis=1)        # (embd_dim, total_cls)
        b_cat = jnp.concatenate(head_bs, axis=0)        # (total_cls,)
        hw_pad = jnp.zeros((self.e_pad, self.n_pad), jnp.float32)
        hw_pad = hw_pad.at[:embd_dim, : self.total_cls].set(w_cat)
        hb_pad = jnp.zeros((1, self.n_pad), jnp.float32)
        hb_pad = hb_pad.at[0, : self.total_cls].set(b_cat)

        # bf16 MXU operands (f32 accumulation in-kernel); biases stay f32.
        self.bb_w_pad = bb_w_pad.astype(jnp.bfloat16)
        self.bb_b_pad = bb_b_pad
        self.head_w_pad = hw_pad.astype(jnp.bfloat16)
        self.head_b_pad = hb_pad

    # ------------------------------------------------------------------ task control
    def update_fc(self):
        self._cur_task_id += 1

    def update_input_matrix(self, x):
        # TODO(synk): the original routes x through the backbone with
        # get_input_matrix=True to collect activation statistics for the LoRA
        # experts; no backbone stand-in state to update here.
        del x

    # ------------------------------------------------------------------ forward
    def forward(self, x, expert_id, inference=False):
        del expert_id  # unused by the synthetic backbone stand-in
        B = x.shape[0]
        # Cast to bf16 BEFORE padding: halves the wrapper pad/copy bytes; the pad is
        # jitted together with the kernel in _padded_forward.
        x_flat = x.reshape(B, -1).astype(jnp.bfloat16)

        # Batch padded to full bf16 vregs (16 sublanes); round to the M tile when the
        # batch is large enough to be tiled.
        b_pad = _round_up(max(B, 1), SUBLANE_BF16)
        if b_pad > MAX_TM:
            b_pad = _round_up(b_pad, MAX_TM)
        tm, tk = _pick_tiles(b_pad, self.d_in_pad, self.e_pad, self.n_pad)
        est = _vmem_bytes(tm, tk, self.e_pad, self.n_pad)
        vmem_limit = int(min(max(est + (est >> 2), 4 << 20), 60 << 20))

        logits_pad = _padded_forward(
            x_flat, self.bb_w_pad, self.bb_b_pad, self.head_w_pad, self.head_b_pad,
            b_pad=b_pad, d_in_pad=self.d_in_pad, tm=tm, tk=tk, vmem_limit=vmem_limit,
        )
        # NOTE: padded batch rows carry gelu(bbb)-derived garbage; they are sliced
        # off here and must be masked if the kernel ever reduces over the batch axis.
        if inference:
            # torch.cat of heads 0..cur_task along dim=1 == first cum[cur+1] columns.
            return logits_pad[:B, : self.cum_cls[self._cur_task_id + 1]]
        lo = self.cum_cls[self._cur_task_id]
        hi = self.cum_cls[self._cur_task_id + 1]
        return logits_pad[:B, lo:hi]

    # ------------------------------------------------------------------ reference
    def forward_ref(self, x, expert_id, inference=False):
        """Pure-JAX reference mirroring the kernel's bf16-operand / f32-accumulate math."""
        del expert_id
        B = x.shape[0]
        xb = x.reshape(B, -1).astype(jnp.bfloat16)
        feat = jax.nn.gelu(
            jnp.dot(xb, self.bb_w_f32.astype(jnp.bfloat16),
                    preferred_element_type=jnp.float32) + self.bb_b_f32,
            approximate=True,
        )
        if inference:
            ws = self.head_ws_f32[: self._cur_task_id + 1]
            bs = self.head_bs_f32[: self._cur_task_id + 1]
        else:
            ws = [self.head_ws_f32[self._cur_task_id]]
            bs = [self.head_bs_f32[self._cur_task_id]]
        outs = [
            jnp.dot(feat.astype(jnp.bfloat16), w.astype(jnp.bfloat16),
                    preferred_element_type=jnp.float32) + b
            for w, b in zip(ws, bs)
        ]
        return jnp.concatenate(outs, axis=1)


# ----------------------------------------------------------------------------- main
if __name__ == "__main__":
    key = jax.random.PRNGKey(0)
    k_param, k_x = jax.random.split(key)

    B, C, H, W = 2, 4, 16, 16
    model = SiNetPallas(
        in_chw=(C, H, W),
        embd_dim=32,
        init_cls_num=4,
        inc_cls_num=3,
        task_num=3,
        key=k_param,
    )

    x = jax.random.normal(k_x, (B, C, H, W), jnp.float32)  # NCHW, like torch

    # two tasks seen so far -> cur_task_id == 1
    model.update_fc()
    model.update_fc()

    # training-mode forward: only current head -> (B, inc_cls_num)
    logits_train = model.forward(x, expert_id=0, inference=False)
    # inference-mode forward: heads 0..cur_task concatenated -> (B, 4 + 3)
    logits_infer = model.forward(x, expert_id=0, inference=True)
    jax.block_until_ready((logits_train, logits_infer))

    assert logits_train.shape == (B, 3), logits_train.shape
    assert logits_infer.shape == (B, 7), logits_infer.shape

    ref_train = model.forward_ref(x, expert_id=0, inference=False)
    ref_infer = model.forward_ref(x, expert_id=0, inference=True)
    assert jnp.allclose(logits_train, ref_train, atol=1e-3, rtol=1e-3), float(
        jnp.max(jnp.abs(logits_train - ref_train))
    )
    assert jnp.allclose(logits_infer, ref_infer, atol=1e-3, rtol=1e-3), float(
        jnp.max(jnp.abs(logits_infer - ref_infer))
    )

    print("KERNEL_OK")
</pallas_src>

<mosaic_0001>
module attributes {stable_mosaic.version = 11 : i64} {
  func.func @_fused_backbone_heads_kernel(%arg0: i32, %arg1: i32, %arg2: memref<16x512xbf16, #tpu.memory_space<vmem>>, %arg3: memref<512x128xbf16, #tpu.memory_space<vmem>>, %arg4: memref<1x128xf32, #tpu.memory_space<vmem>>, %arg5: memref<128x128xbf16, #tpu.memory_space<vmem>>, %arg6: memref<1x128xf32, #tpu.memory_space<vmem>>, %arg7: memref<16x128xf32, #tpu.memory_space<vmem>>, %arg8: memref<16x128xf32, #tpu.memory_space<vmem>>) attributes {dimension_semantics = [#tpu.dimension_semantics<parallel>, #tpu.dimension_semantics<arbitrary>], iteration_bounds = array<i64: 1, 2>, scalar_prefetch = 0 : i64, scratch_operands = 1 : i64, tpu.core_type = #tpu.core_type<tc>, window_params = [{transform_indices = @transform_0, window_bounds = array<i64: 16, 512>}, {transform_indices = @transform_1, window_bounds = array<i64: 512, 128>}, {pipeline_mode = #tpu.pipeline_mode<synchronous>, transform_indices = @transform_2, window_bounds = array<i64: 1, 128>}, {pipeline_mode = #tpu.pipeline_mode<synchronous>, transform_indices = @transform_3, window_bounds = array<i64: 128, 128>}, {pipeline_mode = #tpu.pipeline_mode<synchronous>, transform_indices = @transform_4, window_bounds = array<i64: 1, 128>}, {transform_indices = @transform_5, window_bounds = array<i64: 16, 128>}]} {
    %c0_i32 = arith.constant 0 : i32
    %0 = arith.cmpi eq, %arg1, %c0_i32 : i32
    %1 = arith.extui %0 : i1 to i32
    %c0_i32_0 = arith.constant 0 : i32
    %2 = arith.cmpi ne, %1, %c0_i32_0 : i32
    scf.if %2 {
      %cst_9 = arith.constant 0.000000e+00 : f32
      %12 = vector.broadcast %cst_9 : f32 to vector<16x128xf32>
      %c0_10 = arith.constant 0 : index
      %c0_11 = arith.constant 0 : index
      %13 = vector.load %arg8[%c0_10, %c0_11] : memref<16x128xf32, #tpu.memory_space<vmem>>, vector<16x128xf32>
      tpu.vector_store %arg8[%c0_10, %c0_11], %12 {strides = array<i32>} : memref<16x128xf32, #tpu.memory_space<vmem>>, vector<16x128xf32>,
    } else {
    }
    %c0 = arith.constant 0 : index
    %c0_1 = arith.constant 0 : index
    %3 = vector.load %arg8[%c0, %c0_1] : memref<16x128xf32, #tpu.memory_space<vmem>>, vector<16x128xf32>
    %c0_2 = arith.constant 0 : index
    %c0_3 = arith.constant 0 : index
    %4 = vector.load %arg2[%c0_2, %c0_3] : memref<16x512xbf16, #tpu.memory_space<vmem>>, vector<16x512xbf16>
    %c0_4 = arith.constant 0 : index
    %c0_5 = arith.constant 0 : index
    %5 = vector.load %arg3[%c0_4, %c0_5] : memref<512x128xbf16, #tpu.memory_space<vmem>>, vector<512x128xbf16>
    %cst = arith.constant dense<0.000000e+00> : vector<16x128xf32>
    %6 = tpu.matmul %4, %5, %cst {dimension_numbers = #tpu.dot_dimension_numbers<[1], [0], [0], [1], [0, 0, 1, 1], [], []>} : vector<16x512xbf16>, vector<512x128xbf16>, vector<16x128xf32> -> vector<16x128xf32>
    %7 = arith.addf %3, %6 : vector<16x128xf32>
    %c0_6 = arith.constant 0 : index
    %c0_7 = arith.constant 0 : index
    %8 = vector.load %arg8[%c0_6, %c0_7] : memref<16x128xf32, #tpu.memory_space<vmem>>, vector<16x128xf32>
    tpu.vector_store %arg8[%c0_6, %c0_7], %7 {strides = array<i32>} : memref<16x128xf32, #tpu.memory_space<vmem>>, vector<16x128xf32>,
    %c1_i32 = arith.constant 1 : i32
    %9 = arith.cmpi eq, %arg1, %c1_i32 : i32
    %10 = arith.extui %9 : i1 to i32
    %c0_i32_8 = arith.constant 0 : i32
    %11 = arith.cmpi ne, %10, %c0_i32_8 : i32
    scf.if %11 {
      %c0_9 = arith.constant 0 : index
      %c0_10 = arith.constant 0 : index
      %12 = vector.load %arg8[%c0_9, %c0_10] : memref<16x128xf32, #tpu.memory_space<vmem>>, vector<16x128xf32>
      %c0_11 = arith.constant 0 : index
      %c0_12 = arith.constant 0 : index
      %13 = vector.load %arg4[%c0_11, %c0_12] : memref<1x128xf32, #tpu.memory_space<vmem>>, vector<1x128xf32>
      %14 = vector.broadcast %13 : vector<1x128xf32> to vector<16x128xf32>
      %15 = arith.addf %12, %14 : vector<16x128xf32>
      %16 = arith.mulf %15, %15 : vector<16x128xf32>
      %17 = arith.mulf %15, %16 : vector<16x128xf32>
      %cst_13 = arith.constant 4.471500e-02 : f32
      %18 = vector.broadcast %cst_13 : f32 to vector<16x128xf32>
      %19 = arith.mulf %18, %17 : vector<16x128xf32>
      %20 = arith.addf %15, %19 : vector<16x128xf32>
      %cst_14 = arith.constant 0.797884583 : f32
      %21 = vector.broadcast %cst_14 : f32 to vector<16x128xf32>
      %22 = arith.mulf %21, %20 : vector<16x128xf32>
      %23 = math.tanh %22 : vector<16x128xf32>
      %cst_15 = arith.constant 1.000000e+00 : f32
      %24 = vector.broadcast %cst_15 : f32 to vector<16x128xf32>
      %25 = arith.addf %24, %23 : vector<16x128xf32>
      %cst_16 = arith.constant 5.000000e-01 : f32
      %26 = vector.broadcast %cst_16 : f32 to vector<16x128xf32>
      %27 = arith.mulf %26, %25 : vector<16x128xf32>
      %28 = arith.mulf %15, %27 : vector<16x128xf32>
      %29 = arith.truncf %28 : vector<16x128xf32> to vector<16x128xbf16>
      %c0_17 = arith.constant 0 : index
      %c0_18 = arith.constant 0 : index
      %30 = vector.load %arg5[%c0_17, %c0_18] : memref<128x128xbf16, #tpu.memory_space<vmem>>, vector<128x128xbf16>
      %cst_19 = arith.constant dense<0.000000e+00> : vector<16x128xf32>
      %31 = tpu.matmul %29, %30, %cst_19 {dimension_numbers = #tpu.dot_dimension_numbers<[1], [0], [0], [1], [0, 0, 1, 1], [], []>} : vector<16x128xbf16>, vector<128x128xbf16>, vector<16x128xf32> -> vector<16x128xf32>
      %c0_20 = arith.constant 0 : index
      %c0_21 = arith.constant 0 : index
      %32 = vector.load %arg6[%c0_20, %c0_21] : memref<1x128xf32, #tpu.memory_space<vmem>>, vector<1x128xf32>
      %33 = vector.broadcast %32 : vector<1x128xf32> to vector<16x128xf32>
      %34 = arith.addf %31, %33 : vector<16x128xf32>
      %c0_22 = arith.constant 0 : index
      %c0_23 = arith.constant 0 : index
      %35 = vector.load %arg7[%c0_22, %c0_23] : memref<16x128xf32, #tpu.memory_space<vmem>>, vector<16x128xf32>
      tpu.vector_store %arg7[%c0_22, %c0_23], %34 {strides = array<i32>} : memref<16x128xf32, #tpu.memory_space<vmem>>, vector<16x128xf32>,
    } else {
    }
    return
  }
  func.func @transform_0(%arg0: i32, %arg1: i32) -> (i32, i32) {
    %c0_i32 = arith.constant 0 : i32
    return %arg0, %arg1 : i32, i32
  }
  func.func @transform_1(%arg0: i32, %arg1: i32) -> (i32, i32) {
    %c0_i32 = arith.constant 0 : i32
    %c0_i32_0 = arith.constant 0 : i32
    return %arg1, %c0_i32 : i32, i32
  }
  func.func @transform_2(%arg0: i32, %arg1: i32) -> (i32, i32) {
    %c0_i32 = arith.constant 0 : i32
    %c0_i32_0 = arith.constant 0 : i32
    %c0_i32_1 = arith.constant 0 : i32
    return %c0_i32, %c0_i32_0 : i32, i32
  }
  func.func @transform_3(%arg0: i32, %arg1: i32) -> (i32, i32) {
    %c0_i32 = arith.constant 0 : i32
    %c0_i32_0 = arith.constant 0 : i32
    %c0_i32_1 = arith.constant 0 : i32
    return %c0_i32, %c0_i32_0 : i32, i32
  }
  func.func @transform_4(%arg0: i32, %arg1: i32) -> (i32, i32) {
    %c0_i32 = arith.constant 0 : i32
    %c0_i32_0 = arith.constant 0 : i32
    %c0_i32_1 = arith.constant 0 : i32
    return %c0_i32, %c0_i32_0 : i32, i32
  }
  func.func @transform_5(%arg0: i32, %arg1: i32) -> (i32, i32) {
    %c0_i32 = arith.constant 0 : i32
    %c0_i32_0 = arith.constant 0 : i32
    return %arg0, %c0_i32 : i32, i32
  }
}

</mosaic_0001>

<llo_original>
// kernel: _padded_forward.1
$region0: #{_padded_forward.1}
  #allocation0 [shape = 'u32[]', space=smem, size = 0x4, offset = 0x4, fixed_abs, tag = 'smem constant byte address 0x4 - core index']
  #allocation1 [shape = 'u32[72,128]{1,0:T(1,128)}', space=vmem, size = 0x9000, scoped, tag = 'internal scratch']
  #allocation2 [shape = 'f32[16,128]{1,0:T(8,128)}', space=vmem, size = 0x2000, scoped, tag = 'scratch operand']
  %s0 = inlined_call_operand.vmem [shape: bf16[16,1024], index: 0, kind: input, shape index: {}]
  %s1 = inlined_call_operand.hbm [shape: bf16[1024,128], index: 1, kind: input, shape index: {}]
  %s2 = inlined_call_operand.vmem [shape: f32[1,128], index: 2, kind: input, shape index: {}]
  %s3 = inlined_call_operand.vmem [shape: bf16[128,128], index: 3, kind: input, shape index: {}]
  %s4 = inlined_call_operand.vmem [shape: f32[1,128], index: 4, kind: input, shape index: {}]
  %s5 = inlined_call_operand.hbm [shape: f32[16,128], index: 5, kind: output, shape index: {}]
  %s6 = sld [smem:[#allocation0]]
  $region88: #{_padded_forward.1} parent=0
    _
  %s8 = ssub.s32 1, %s6
  %s9 = scalar_select 0, %s8, %s6
  $region1: #{_padded_forward.1} parent=0
    #allocation3 [shape = 'u8[32768]{0}', space=vmem, size = 0x8000, scoped, tag = 'input window, operand 0']
    #allocation4 [shape = 'u8[262144]{0}', space=vmem, size = 0x40000, scoped, tag = 'input window, operand 1']
    #allocation5 [shape = 's32[2]{0}', space=sflag, size = 0x8, scoped, tag = 'scoped memory for _padded_forward.1']
    #allocation6 [shape = 's32[2]{0}', space=sflag, size = 0x8, scoped, tag = 'scoped memory for _padded_forward.1']
    #allocation7 [shape = 'u8[8192]{0}', space=vmem, size = 0x2000, scoped, tag = 'output window, operand 0, single buffered']
    %10 = vsyncpa [#allocation5], 0
    %s11 = scalar_lea.sflag [#allocation5], 1
    %12 = vsyncpa %s11, 0
    %13 = vsyncpa [#allocation6], 0
    loop: start=0, step=1, limit=4
    $region2: #{_padded_forward.1} parent=1 // loop_pre_header
      _
    $region3: #{_padded_forward.1} parent=1 // loop_header
      %s15 = sphi 0, %s19
      %p16 = scmp.ge.s32.totalorder %s15, 4
      %s22 = sphi 0, %s34
      %s23 = sphi 0, %s30
      %s24 = sphi 0, %s22
      %s25 = sphi 0, %s23
      %s26 = sphi 0, %s24
      %s27 = sphi 0, %s25
      %s39 = sphi 0, %s41
      %s42 = sphi 0, %s39
      %s43 = sphi 0, %s42
      %s59 = sphi 0, %s43
      %s65 = sphi 0, %s67
      %s68 = sphi 0, %s65
      %s69 = sphi 0, %s68
      %s85 = sphi 0, %s69
      %s89 = sphi 0, %s89
      %s91 = sphi 0, %s89
      %s92 = sphi 0, %s91
      %s106 = sphi 0, %s92
      %s110 = sphi 0, %s110
      %s112 = sphi 0, %s110
      %s113 = sphi 0, %s112
      %s127 = sphi 0, %s113
      %s131 = sphi 0, %s131
      %s133 = sphi 0, %s131
      %s134 = sphi 0, %s133
      %s148 = sphi 0, %s134
      %s154 = sphi 0, %s156
      %s157 = sphi 0, %s154
      %s158 = sphi 0, %s157
      %s174 = sphi 0, %s158
    $region4: #{_padded_forward.1} parent=1 // loop_header_branch
      %18 = sbr.rel (%p16) target = $region8
    $region5: #{_padded_forward.1} parent=1 // loop_body
      %s20 = ssub.s32 %s15, 1
      %s21 = ssub.s32 %s15, 2
      %s28 = sadd.s32 1, %s23
      %p29 = scmp.ge.s32.totalorder %s28, 2
      %s30 = scalar_select %p29, 0, %s28
      %s31 = sadd.s32 1, %s22
      %s32 = scalar_select %p29, %s31, %s22
      %p33 = scmp.ge.s32.totalorder %s32, 1
      %s34 = scalar_select %p33, 0, %s32
      %s35 = ssub.s32 %s22, %s34
      %s36 = ssub.s32 %s23, %s30
      %s37 = sor.u32 %s35, %s36
      %p38 = scmp.eq.s32.totalorder %s37, 0
      %s40 = sadd.s32 %s39, 1
      %s41 = scalar_select %p38, %s39, %s40
      %p44 = pneg %p38
      %p45 = scmp.eq.s32.totalorder %s15, 1
      %p46 = por %p44, %p45
      %p47 = scmp.ne.s32.totalorder %s39, %s42
      %p48 = scmp.eq.s32.totalorder %s15, 0
      %p49 = por %p47, %p48
      %p50 = scmp.ne.s32.totalorder %s39, %s42
      %p51 = scmp.eq.s32.totalorder %s20, 1
      %p52 = por %p50, %p51
      %p53 = scmp.ne.s32.totalorder %s42, %s43
      %p54 = scmp.eq.s32.totalorder %s20, 0
      %p55 = por %p53, %p54
      %p56 = scmp.ne.s32.totalorder %s42, %s43
      %p57 = scmp.eq.s32.totalorder %s21, 1
      %p58 = por %p56, %p57
      %p60 = scmp.ne.s32.totalorder %s43, %s59
      %p61 = scmp.eq.s32.totalorder %s21, 0
      %p62 = por %p60, %p61
      %s63 = ssub.s32 %s23, %s30
      %p64 = scmp.eq.s32.totalorder %s63, 0
      %s66 = sadd.s32 %s65, 1
      %s67 = scalar_select %p64, %s65, %s66
      %p70 = pneg %p64
      %p71 = scmp.eq.s32.totalorder %s15, 1
      %p72 = por %p70, %p71
      %p73 = scmp.ne.s32.totalorder %s65, %s68
      %p74 = scmp.eq.s32.totalorder %s15, 0
      %p75 = por %p73, %p74
      %p76 = scmp.ne.s32.totalorder %s65, %s68
      %p77 = scmp.eq.s32.totalorder %s20, 1
      %p78 = por %p76, %p77
      %p79 = scmp.ne.s32.totalorder %s68, %s69
      %p80 = scmp.eq.s32.totalorder %s20, 0
      %p81 = por %p79, %p80
      %p82 = scmp.ne.s32.totalorder %s68, %s69
      %p83 = scmp.eq.s32.totalorder %s21, 1
      %p84 = por %p82, %p83
      %p86 = scmp.ne.s32.totalorder %s69, %s85
      %p87 = scmp.eq.s32.totalorder %s21, 0
      %p88 = por %p86, %p87
      %s90 = sadd.s32 %s89, 1
      %p93 = scmp.eq.s32.totalorder %s15, 1
      %p94 = scmp.ne.s32.totalorder %s89, %s91
      %p95 = scmp.eq.s32.totalorder %s15, 0
      %p96 = por %p94, %p95
      %p97 = scmp.ne.s32.totalorder %s89, %s91
      %p98 = scmp.eq.s32.totalorder %s20, 1
      %p99 = por %p97, %p98
      %p100 = scmp.ne.s32.totalorder %s91, %s92
      %p101 = scmp.eq.s32.totalorder %s20, 0
      %p102 = por %p100, %p101
      %p103 = scmp.ne.s32.totalorder %s91, %s92
      %p104 = scmp.eq.s32.totalorder %s21, 1
      %p105 = por %p103, %p104
      %p107 = scmp.ne.s32.totalorder %s92, %s106
      %p108 = scmp.eq.s32.totalorder %s21, 0
      %p109 = por %p107, %p108
      %s111 = sadd.s32 %s110, 1
      %p114 = scmp.eq.s32.totalorder %s15, 1
      %p115 = scmp.ne.s32.totalorder %s110, %s112
      %p116 = scmp.eq.s32.totalorder %s15, 0
      %p117 = por %p115, %p116
      %p118 = scmp.ne.s32.totalorder %s110, %s112
      %p119 = scmp.eq.s32.totalorder %s20, 1
      %p120 = por %p118, %p119
      %p121 = scmp.ne.s32.totalorder %s112, %s113
      %p122 = scmp.eq.s32.totalorder %s20, 0
      %p123 = por %p121, %p122
      %p124 = scmp.ne.s32.totalorder %s112, %s113
      %p125 = scmp.eq.s32.totalorder %s21, 1
      %p126 = por %p124, %p125
      %p128 = scmp.ne.s32.totalorder %s113, %s127
      %p129 = scmp.eq.s32.totalorder %s21, 0
      %p130 = por %p128, %p129
      %s132 = sadd.s32 %s131, 1
      %p135 = scmp.eq.s32.totalorder %s15, 1
      %p136 = scmp.ne.s32.totalorder %s131, %s133
      %p137 = scmp.eq.s32.totalorder %s15, 0
      %p138 = por %p136, %p137
      %p139 = scmp.ne.s32.totalorder %s131, %s133
      %p140 = scmp.eq.s32.totalorder %s20, 1
      %p141 = por %p139, %p140
      %p142 = scmp.ne.s32.totalorder %s133, %s134
      %p143 = scmp.eq.s32.totalorder %s20, 0
      %p144 = por %p142, %p143
      %p145 = scmp.ne.s32.totalorder %s133, %s134
      %p146 = scmp.eq.s32.totalorder %s21, 1
      %p147 = por %p145, %p146
      %p149 = scmp.ne.s32.totalorder %s134, %s148
      %p150 = scmp.eq.s32.totalorder %s21, 0
      %p151 = por %p149, %p150
      %s152 = ssub.s32 %s22, %s34
      %p153 = scmp.eq.s32.totalorder %s152, 0
      %s155 = sadd.s32 %s154, 1
      %s156 = scalar_select %p153, %s154, %s155
      %p159 = pneg %p153
      %p160 = scmp.eq.s32.totalorder %s15, 1
      %p161 = por %p159, %p160
      %p162 = scmp.ne.s32.totalorder %s154, %s157
      %p163 = scmp.eq.s32.totalorder %s15, 0
      %p164 = por %p162, %p163
      %p165 = scmp.ne.s32.totalorder %s154, %s157
      %p166 = scmp.eq.s32.totalorder %s20, 1
      %p167 = por %p165, %p166
      %p168 = scmp.ne.s32.totalorder %s157, %s158
      %p169 = scmp.eq.s32.totalorder %s20, 0
      %p170 = por %p168, %p169
      %p171 = scmp.ne.s32.totalorder %s157, %s158
      %p172 = scmp.eq.s32.totalorder %s21, 1
      %p173 = por %p171, %p172
      %p175 = scmp.ne.s32.totalorder %s158, %s174
      %p176 = scmp.eq.s32.totalorder %s21, 0
      %p177 = por %p175, %p176
      %p178 = scmp.le.s32.totalorder 1, %s15
      %p179 = scmp.lt.s32.totalorder %s15, 3
      %p180 = pnand %p178, %p179
      %p181 = pneg %p180
      // Predicated region
      $region9: #{_padded_forward.1} parent=5 // pred_check
        _
      $region10: #{_padded_forward.1} parent=5 // pred_check_branch
        %183 = sbr.rel (%p180) target = $region12
      $region11: #{_padded_forward.1} parent=5 // pred_region
        %s184 = ssub.s32 %s15, 1
        // Predicated region
        $region13: #{_padded_forward.1} parent=11 // pred_check
          %p185 = pneg %p102
        $region14: #{_padded_forward.1} parent=11 // pred_check_branch
          %187 = sbr.rel (%p185) target = $region16
        $region15: #{_padded_forward.1} parent=11 // pred_region
          _
        $region16: #{_padded_forward.1} parent=11 // pred_fallthru
          _
        // Predicated region
        $region17: #{_padded_forward.1} parent=11 // pred_check
          %p188 = pneg %p123
        $region18: #{_padded_forward.1} parent=11 // pred_check_branch
          %190 = sbr.rel (%p188) target = $region20
        $region19: #{_padded_forward.1} parent=11 // pred_region
          _
        $region20: #{_padded_forward.1} parent=11 // pred_fallthru
          _
        // Predicated region
        $region21: #{_padded_forward.1} parent=11 // pred_check
          %p191 = pneg %p144
        $region22: #{_padded_forward.1} parent=11 // pred_check_branch
          %193 = sbr.rel (%p191) target = $region24
        $region23: #{_padded_forward.1} parent=11 // pred_region
          _
        $region24: #{_padded_forward.1} parent=11 // pred_fallthru
          _
      $region12: #{_padded_forward.1} parent=5 // pred_fallthru
        _
      %p194 = scmp.lt.s32.totalorder %s15, 2
      // Predicated region
      $region25: #{_padded_forward.1} parent=5 // pred_check
        %p195 = pneg %p194
      $region26: #{_padded_forward.1} parent=5 // pred_check_branch
        %197 = sbr.rel (%p195) target = $region28
      $region27: #{_padded_forward.1} parent=5 // pred_region
        // Predicated region
        $region29: #{_padded_forward.1} parent=27 // pred_check
          %p198 = pneg %p49
        $region30: #{_padded_forward.1} parent=27 // pred_check_branch
          %200 = sbr.rel (%p198) target = $region32
        $region31: #{_padded_forward.1} parent=27 // pred_region
          %s201 = sand.u32 %s39, 1
          %s202 = sand.u32 %s39, 1
          %s203 = smul.addr %s202, 32
          %s204 = scalar_lea.vmem [#allocation3], %s203
          %s205 = smul.u32 2, %s22
          %s206 = smul.u32 4, %s23
          %s207 = smul.addr %s205, 8
          %s208 = sadd.s32 %s206, %s207
          %s209 = smul.addr %s208, 4
          %s210 = scalar_lea.vmem %s0, %s209
          // Predicated region
          $region33: #{_padded_forward.1} parent=31 // pred_check
            _
          $region34: #{_padded_forward.1} parent=31 // pred_check_branch
            %212 = sbr.rel (0) target = $region36
          $region35: #{_padded_forward.1} parent=31 // pred_region
            // Predicated region
            $region37: #{_padded_forward.1} parent=35 // pred_check
              _
            $region38: #{_padded_forward.1} parent=35 // pred_check_branch
              %214 = sbr.rel (0) target = $region40
            $region39: #{_padded_forward.1} parent=35 // pred_region
              loop: start=0, step=1, limit=1
              $region41: #{_padded_forward.1} parent=39 // loop_pre_header
                _
              $region42: #{_padded_forward.1} parent=39 // loop_header
                %s216 = sphi 0, %s220
                %p217 = scmp.ge.s32.totalorder %s216, 1
                %s221 = sphi %s210, %s210
                %s222 = sphi %s204, %s204
              $region43: #{_padded_forward.1} parent=39 // loop_header_branch
                %219 = sbr.rel (%p217) target = $region47
              $region44: #{_padded_forward.1} parent=39 // loop_body
                %v223 = vld [vmem:[%s221] sm:$0xff]
                %224 = vst [vmem:[%s222] sm:$0xff] %v223
                %v225 = vld [vmem:[%s221 + $0x8] sm:$0xff]
                %226 = vst [vmem:[%s222 + $0x8] sm:$0xff] %v225
                %v227 = vld [vmem:[%s221 + $0x20] sm:$0xff]
                %228 = vst [vmem:[%s222 + $0x10] sm:$0xff] %v227
                %v229 = vld [vmem:[%s221 + $0x28] sm:$0xff]
                %230 = vst [vmem:[%s222 + $0x18] sm:$0xff] %v229
              $region45: #{_padded_forward.1} parent=39 // loop_footer
                %s220 = sadd.s32 1, %s216
              $region46: #{_padded_forward.1} parent=39 // loop_footer_branch
                %215 = sbr.rel target = $region42
              $region47: #{_padded_forward.1} parent=39 // loop_exit
                _
            $region40: #{_padded_forward.1} parent=35 // pred_fallthru
              _
            // Predicated region
            $region48: #{_padded_forward.1} parent=35 // pred_check
              _
            $region49: #{_padded_forward.1} parent=35 // pred_check_branch
              %232 = sbr.rel target = $region51
            $region50: #{_padded_forward.1} parent=35 // pred_region
              _
            $region51: #{_padded_forward.1} parent=35 // pred_fallthru
              _
          $region36: #{_padded_forward.1} parent=31 // pred_fallthru
            _
          %233 = vnop
        $region32: #{_padded_forward.1} parent=27 // pred_fallthru
          _
        // Predicated region
        $region52: #{_padded_forward.1} parent=27 // pred_check
          %p234 = pneg %p75
        $region53: #{_padded_forward.1} parent=27 // pred_check_branch
          %236 = sbr.rel (%p234) target = $region55
        $region54: #{_padded_forward.1} parent=27 // pred_region
          %s237 = sand.u32 %s65, 1
          %s238 = scalar_lea.sflag [#allocation5], %s237
          %s239 = sand.u32 %s65, 1
          %s240 = smul.addr %s239, 256
          %s241 = scalar_lea.vmem [#allocation4], %s240
          %s242 = smul.u32 64, %s23
          %244 = vsyncadd %s238, 0
          %s245 = smul.addr %s242, 4
          %s246 = scalar_lea.hbm %s1, %s245
          %s247 = sshll.u32 %s246, 4
          %s248 = int_to_ptr.hbm [resolvable:$true] %s247
          %s249 = sshll.u32 %s241, 4
          %s250 = int_to_ptr.vmem [resolvable:$true] %s249
          %255 = dma.hbm_to_vmem [thread:$0]  %s248, 4096, %s250, %s238, 64, 64, 4
        $region55: #{_padded_forward.1} parent=27 // pred_fallthru
          _
      $region28: #{_padded_forward.1} parent=5 // pred_fallthru
        _
      %p256 = scmp.le.s32.totalorder 1, %s15
      %p257 = scmp.lt.s32.totalorder %s15, 3
      %p258 = pnand %p256, %p257
      %p259 = pneg %p258
      // Predicated region
      $region56: #{_padded_forward.1} parent=5 // pred_check
        _
      $region57: #{_padded_forward.1} parent=5 // pred_check_branch
        %261 = sbr.rel (%p258) target = $region59
      $region58: #{_padded_forward.1} parent=5 // pred_region
        %s262 = ssub.s32 %s15, 1
        %s263 = sand.u32 %s42, 1
        %s264 = sand.u32 %s42, 1
        %s265 = smul.addr %s264, 32
        %s266 = scalar_lea.vmem [#allocation3], %s265
        // Predicated region
        $region60: #{_padded_forward.1} parent=58 // pred_check
          %p267 = pneg %p55
        $region61: #{_padded_forward.1} parent=58 // pred_check_branch
          %269 = sbr.rel (%p267) target = $region63
        $region62: #{_padded_forward.1} parent=58 // pred_region
          _
        $region63: #{_padded_forward.1} parent=58 // pred_fallthru
          _
        %s270 = sand.u32 %s68, 1
        %s271 = scalar_lea.sflag [#allocation5], %s270
        %s272 = sand.u32 %s68, 1
        %s273 = smul.addr %s272, 256
        %s274 = scalar_lea.vmem [#allocation4], %s273
        // Predicated region
        $region64: #{_padded_forward.1} parent=58 // pred_check
          %p275 = pneg %p81
        $region65: #{_padded_forward.1} parent=58 // pred_check_branch
          %277 = sbr.rel (%p275) target = $region67
        $region66: #{_padded_forward.1} parent=58 // pred_region
          %279 = dma.done %s271, 4096
        $region67: #{_padded_forward.1} parent=58 // pred_fallthru
          _
        %s280 = sand.u32 %s42, 1
        %s281 = sand.u32 %s42, 1
        %s282 = smul.addr %s281, 32
        %s283 = scalar_lea.vmem [#allocation3], %s282
        %p284 = pneg %p55
        %p285 = pneg %p52
        %s286 = sand.u32 %s68, 1
        %s287 = scalar_lea.sflag [#allocation5], %s286
        %s288 = sand.u32 %s68, 1
        %s289 = smul.addr %s288, 256
        %s290 = scalar_lea.vmem [#allocation4], %s289
        %p291 = pneg %p81
        %p292 = pneg %p78
        %p293 = pneg %p102
        %p294 = pneg %p99
        %p295 = pneg %p123
        %p296 = pneg %p120
        %p297 = pneg %p144
        %p298 = pneg %p141
        %p299 = pneg %p170
        %p300 = pneg %p167
        %s301 = smul.u32 2, %s24
        %s302 = smul.u32 4, %s25
        %s303 = smul.u32 64, %s25
        %s304 = smul.u32 2, %s24
        %p305 = scmp.eq.s32.totalorder %s25, 0
        // Predicated region
        $region68: #{_padded_forward.1} parent=58 // pred_check
          %p306 = pneg %p305
        $region69: #{_padded_forward.1} parent=58 // pred_check_branch
          %308 = sbr.rel (%p306) target = $region71
        $region70: #{_padded_forward.1} parent=58 // pred_region
          %309 = vst [vmem:[#allocation2] sm:$0xff] 0.0
          %310 = vst [vmem:[#allocation2 + $0x8] sm:$0xff] 0.0
        $region71: #{_padded_forward.1} parent=58 // pred_fallthru
          _
        %v311 = vld [vmem:[#allocation2] sm:$0xff]
        %v312 = vld [vmem:[#allocation2 + $0x8] sm:$0xff]
        %v313 = vld [vmem:[%s266] sm:$0xff]
        %v314 = vld [vmem:[%s266 + $0x8] sm:$0xff]
        %v315 = vld [vmem:[%s266 + $0x10] sm:$0xff]
        %v316 = vld [vmem:[%s266 + $0x18] sm:$0xff]
        %v317 = vld [vmem:[%s274] sm:$0xf]
        %v318 = vld [vmem:[%s274 + $0x4] sm:$0xf]
        %v319 = vld [vmem:[%s274 + $0x8] sm:$0xf]
        %v320 = vld [vmem:[%s274 + $0xc] sm:$0xf]
        %v321 = vld [vmem:[%s274 + $0x10] sm:$0xf]
        %v322 = vld [vmem:[%s274 + $0x14] sm:$0xf]
        %v323 = vld [vmem:[%s274 + $0x18] sm:$0xf]
        %v324 = vld [vmem:[%s274 + $0x1c] sm:$0xf]
        %v325 = vld [vmem:[%s274 + $0x20] sm:$0xf]
        %v326 = vld [vmem:[%s274 + $0x24] sm:$0xf]
        %v327 = vld [vmem:[%s274 + $0x28] sm:$0xf]
        %v328 = vld [vmem:[%s274 + $0x2c] sm:$0xf]
        %v329 = vld [vmem:[%s274 + $0x30] sm:$0xf]
        %v330 = vld [vmem:[%s274 + $0x34] sm:$0xf]
        %v331 = vld [vmem:[%s274 + $0x38] sm:$0xf]
        %v332 = vld [vmem:[%s274 + $0x3c] sm:$0xf]
        %v333 = vld [vmem:[%s274 + $0x40] sm:$0xf]
        %v334 = vld [vmem:[%s274 + $0x44] sm:$0xf]
        %v335 = vld [vmem:[%s274 + $0x48] sm:$0xf]
        %v336 = vld [vmem:[%s274 + $0x4c] sm:$0xf]
        %v337 = vld [vmem:[%s274 + $0x50] sm:$0xf]
        %v338 = vld [vmem:[%s274 + $0x54] sm:$0xf]
        %v339 = vld [vmem:[%s274 + $0x58] sm:$0xf]
        %v340 = vld [vmem:[%s274 + $0x5c] sm:$0xf]
        %v341 = vld [vmem:[%s274 + $0x60] sm:$0xf]
        %v342 = vld [vmem:[%s274 + $0x64] sm:$0xf]
        %v343 = vld [vmem:[%s274 + $0x68] sm:$0xf]
        %v344 = vld [vmem:[%s274 + $0x6c] sm:$0xf]
        %v345 = vld [vmem:[%s274 + $0x70] sm:$0xf]
        %v346 = vld [vmem:[%s274 + $0x74] sm:$0xf]
        %v347 = vld [vmem:[%s274 + $0x78] sm:$0xf]
        %v348 = vld [vmem:[%s274 + $0x7c] sm:$0xf]
        %v349 = vld [vmem:[%s274 + $0x80] sm:$0xf]
        %v350 = vld [vmem:[%s274 + $0x84] sm:$0xf]
        %v351 = vld [vmem:[%s274 + $0x88] sm:$0xf]
        %v352 = vld [vmem:[%s274 + $0x8c] sm:$0xf]
        %v353 = vld [vmem:[%s274 + $0x90] sm:$0xf]
        %v354 = vld [vmem:[%s274 + $0x94] sm:$0xf]
        %v355 = vld [vmem:[%s274 + $0x98] sm:$0xf]
        %v356 = vld [vmem:[%s274 + $0x9c] sm:$0xf]
        %v357 = vld [vmem:[%s274 + $0xa0] sm:$0xf]
        %v358 = vld [vmem:[%s274 + $0xa4] sm:$0xf]
        %v359 = vld [vmem:[%s274 + $0xa8] sm:$0xf]
        %v360 = vld [vmem:[%s274 + $0xac] sm:$0xf]
        %v361 = vld [vmem:[%s274 + $0xb0] sm:$0xf]
        %v362 = vld [vmem:[%s274 + $0xb4] sm:$0xf]
        %v363 = vld [vmem:[%s274 + $0xb8] sm:$0xf]
        %v364 = vld [vmem:[%s274 + $0xbc] sm:$0xf]
        %v365 = vld [vmem:[%s274 + $0xc0] sm:$0xf]
        %v366 = vld [vmem:[%s274 + $0xc4] sm:$0xf]
        %v367 = vld [vmem:[%s274 + $0xc8] sm:$0xf]
        %v368 = vld [vmem:[%s274 + $0xcc] sm:$0xf]
        %v369 = vld [vmem:[%s274 + $0xd0] sm:$0xf]
        %v370 = vld [vmem:[%s274 + $0xd4] sm:$0xf]
        %v371 = vld [vmem:[%s274 + $0xd8] sm:$0xf]
        %v372 = vld [vmem:[%s274 + $0xdc] sm:$0xf]
        %v373 = vld [vmem:[%s274 + $0xe0] sm:$0xf]
        %v374 = vld [vmem:[%s274 + $0xe4] sm:$0xf]
        %v375 = vld [vmem:[%s274 + $0xe8] sm:$0xf]
        %v376 = vld [vmem:[%s274 + $0xec] sm:$0xf]
        %v377 = vld [vmem:[%s274 + $0xf0] sm:$0xf]
        %v378 = vld [vmem:[%s274 + $0xf4] sm:$0xf]
        %v379 = vld [vmem:[%s274 + $0xf8] sm:$0xf]
        %v380 = vld [vmem:[%s274 + $0xfc] sm:$0xf]
        %v385 = vunpack.c.l.b16 %v313
        %v386 = vunpack.c.h.b16 %v313
        %v387 = vunpack.c.l.b16 %v314
        %v388 = vunpack.c.h.b16 %v314
        %v389 = vunpack.c.l.b16 %v315
        %v390 = vunpack.c.h.b16 %v315
        %v391 = vunpack.c.l.b16 %v316
        %v392 = vunpack.c.h.b16 %v316
        %v393 = vpack.c.b16 %v389, %v385
        %v394 = vpack.c.b16 %v390, %v386
        %v395 = vpack.c.b16 %v391, %v387
        %v396 = vpack.c.b16 %v392, %v388
        %v465 = vunpack.c.l.b16 %v317
        %v466 = vunpack.c.l.b16 %v318
        %v467 = vunpack.c.l.b16 %v319
        %v468 = vunpack.c.l.b16 %v320
        %v469 = vunpack.c.l.b16 %v321
        %v470 = vunpack.c.l.b16 %v322
        %v471 = vunpack.c.l.b16 %v323
        %v472 = vunpack.c.l.b16 %v324
        %v473 = vunpack.c.l.b16 %v325
        %v474 = vunpack.c.l.b16 %v326
        %v475 = vunpack.c.l.b16 %v327
        %v476 = vunpack.c.l.b16 %v328
        %v477 = vunpack.c.l.b16 %v329
        %v478 = vunpack.c.l.b16 %v330
        %v479 = vunpack.c.l.b16 %v331
        %v480 = vunpack.c.l.b16 %v332
        %v481 = vunpack.c.l.b16 %v333
        %v482 = vunpack.c.l.b16 %v334
        %v483 = vunpack.c.l.b16 %v335
        %v484 = vunpack.c.l.b16 %v336
        %v485 = vunpack.c.l.b16 %v337
        %v486 = vunpack.c.l.b16 %v338
        %v487 = vunpack.c.l.b16 %v339
        %v488 = vunpack.c.l.b16 %v340
        %v489 = vunpack.c.l.b16 %v341
        %v490 = vunpack.c.l.b16 %v342
        %v491 = vunpack.c.l.b16 %v343
        %v492 = vunpack.c.l.b16 %v344
        %v493 = vunpack.c.l.b16 %v345
        %v494 = vunpack.c.l.b16 %v346
        %v495 = vunpack.c.l.b16 %v347
        %v496 = vunpack.c.l.b16 %v348
        %v497 = vunpack.c.l.b16 %v349
        %v498 = vunpack.c.l.b16 %v350
        %v499 = vunpack.c.l.b16 %v351
        %v500 = vunpack.c.l.b16 %v352
        %v501 = vunpack.c.l.b16 %v353
        %v502 = vunpack.c.l.b16 %v354
        %v503 = vunpack.c.l.b16 %v355
        %v504 = vunpack.c.l.b16 %v356
        %v505 = vunpack.c.l.b16 %v357
        %v506 = vunpack.c.l.b16 %v358
        %v507 = vunpack.c.l.b16 %v359
        %v508 = vunpack.c.l.b16 %v360
        %v509 = vunpack.c.l.b16 %v361
        %v510 = vunpack.c.l.b16 %v362
        %v511 = vunpack.c.l.b16 %v363
        %v512 = vunpack.c.l.b16 %v364
        %v513 = vunpack.c.l.b16 %v365
        %v514 = vunpack.c.l.b16 %v366
        %v515 = vunpack.c.l.b16 %v367
        %v516 = vunpack.c.l.b16 %v368
        %v517 = vunpack.c.l.b16 %v369
        %v518 = vunpack.c.l.b16 %v370
        %v519 = vunpack.c.l.b16 %v371
        %v520 = vunpack.c.l.b16 %v372
        %v521 = vunpack.c.l.b16 %v373
        %v522 = vunpack.c.l.b16 %v374
        %v523 = vunpack.c.l.b16 %v375
        %v524 = vunpack.c.l.b16 %v376
        %v525 = vunpack.c.l.b16 %v377
        %v526 = vunpack.c.l.b16 %v378
        %v527 = vunpack.c.l.b16 %v379
        %v528 = vunpack.c.l.b16 %v380
        %v529 = vpack.c.b16 %v466, %v465
        %v530 = vpack.c.b16 %v468, %v467
        %v531 = vpack.c.b16 %v470, %v469
        %v532 = vpack.c.b16 %v472, %v471
        %v533 = vpack.c.b16 %v474, %v473
        %v534 = vpack.c.b16 %v476, %v475
        %v535 = vpack.c.b16 %v478, %v477
        %v536 = vpack.c.b16 %v480, %v479
        %v537 = vpack.c.b16 %v482, %v481
        %v538 = vpack.c.b16 %v484, %v483
        %v539 = vpack.c.b16 %v486, %v485
        %v540 = vpack.c.b16 %v488, %v487
        %v541 = vpack.c.b16 %v490, %v489
        %v542 = vpack.c.b16 %v492, %v491
        %v543 = vpack.c.b16 %v494, %v493
        %v544 = vpack.c.b16 %v496, %v495
        %v545 = vpack.c.b16 %v498, %v497
        %v546 = vpack.c.b16 %v500, %v499
        %v547 = vpack.c.b16 %v502, %v501
        %v548 = vpack.c.b16 %v504, %v503
        %v549 = vpack.c.b16 %v506, %v505
        %v550 = vpack.c.b16 %v508, %v507
        %v551 = vpack.c.b16 %v510, %v509
        %v552 = vpack.c.b16 %v512, %v511
        %v553 = vpack.c.b16 %v514, %v513
        %v554 = vpack.c.b16 %v516, %v515
        %v555 = vpack.c.b16 %v518, %v517
        %v556 = vpack.c.b16 %v520, %v519
        %v557 = vpack.c.b16 %v522, %v521
        %v558 = vpack.c.b16 %v524, %v523
        %v559 = vpack.c.b16 %v526, %v525
        %v560 = vpack.c.b16 %v528, %v527
        %593 = vmatpush.bf16.msra.mxu0 %v536
        %594 = vmatpush.bf16.msra.mxu0 %v535
        %595 = vmatpush.bf16.msra.mxu0 %v534
        %596 = vmatpush.bf16.msra.mxu0 %v533
        %597 = vmatpush.bf16.msra.mxu0 %v532
        %598 = vmatpush.bf16.msra.mxu0 %v531
        %599 = vmatpush.bf16.msra.mxu0 %v530
        %600 = vmatpush.bf16.msra.mxu0 %v529
        %601 = vmatmul.bf16.gmra.mxu0 %v393
        %v602 = vpop.f32.mrf.mxu0
        %v603 = vadd.f32 0.0, %v602
        %v604 = vpop.f32.mrf.mxu0
        %v605 = vadd.f32 0.0, %v604
        %606 = vdwg.mxu0
        %607 = vmatpush.bf16.msra.mxu0 %v544
        %608 = vmatpush.bf16.msra.mxu0 %v543
        %609 = vmatpush.bf16.msra.mxu0 %v542
        %610 = vmatpush.bf16.msra.mxu0 %v541
        %611 = vmatpush.bf16.msra.mxu0 %v540
        %612 = vmatpush.bf16.msra.mxu0 %v539
        %613 = vmatpush.bf16.msra.mxu0 %v538
        %614 = vmatpush.bf16.msra.mxu0 %v537
        %615 = vmatmul.bf16.gmra.mxu0 %v394
        %v616 = vpop.f32.mrf.mxu0
        %v617 = vadd.f32 %v603, %v616
        %v618 = vpop.f32.mrf.mxu0
        %v619 = vadd.f32 %v605, %v618
        %620 = vdwg.mxu0
        %621 = vmatpush.bf16.msra.mxu0 %v552
        %622 = vmatpush.bf16.msra.mxu0 %v551
        %623 = vmatpush.bf16.msra.mxu0 %v550
        %624 = vmatpush.bf16.msra.mxu0 %v549
        %625 = vmatpush.bf16.msra.mxu0 %v548
        %626 = vmatpush.bf16.msra.mxu0 %v547
        %627 = vmatpush.bf16.msra.mxu0 %v546
        %628 = vmatpush.bf16.msra.mxu0 %v545
        %629 = vmatmul.bf16.gmra.mxu0 %v395
        %v630 = vpop.f32.mrf.mxu0
        %v631 = vadd.f32 %v617, %v630
        %v632 = vpop.f32.mrf.mxu0
        %v633 = vadd.f32 %v619, %v632
        %634 = vdwg.mxu0
        %635 = vmatpush.bf16.msra.mxu0 %v560
        %636 = vmatpush.bf16.msra.mxu0 %v559
        %637 = vmatpush.bf16.msra.mxu0 %v558
        %638 = vmatpush.bf16.msra.mxu0 %v557
        %639 = vmatpush.bf16.msra.mxu0 %v556
        %640 = vmatpush.bf16.msra.mxu0 %v555
        %641 = vmatpush.bf16.msra.mxu0 %v554
        %642 = vmatpush.bf16.msra.mxu0 %v553
        %643 = vmatmul.bf16.gmra.mxu0 %v396
        %v644 = vpop.f32.mrf.mxu0
        %v645 = vadd.f32 %v631, %v644
        %v646 = vpop.f32.mrf.mxu0
        %v647 = vadd.f32 %v633, %v646
        %648 = vdwg.mxu0
        %v649 = vadd.f32 %v311, %v645
        %v650 = vadd.f32 %v312, %v647
        %651 = vst [vmem:[#allocation2] sm:$0xff] %v649
        %652 = vst [vmem:[#allocation2 + $0x8] sm:$0xff] %v650
        %p653 = scmp.eq.s32.totalorder %s25, 1
        // Predicated region
        $region72: #{_padded_forward.1} parent=58 // pred_check
          %p654 = pneg %p653
        $region73: #{_padded_forward.1} parent=58 // pred_check_branch
          %656 = sbr.rel (%p654) target = $region75
        $region74: #{_padded_forward.1} parent=58 // pred_region
          %v657 = vld [vmem:[#allocation2] sm:$0xff]
          %v658 = vld [vmem:[#allocation2 + $0x8] sm:$0xff]
          %v659 = vld [vmem:[%s2] sm:$0x1]
          %v661 = vperm.slane %v659, 0
          %v663 = vadd.f32 %v657, %v661
          %v664 = vadd.f32 %v658, %v661
          %v665 = vmul.f32 %v663, %v663
          %v666 = vmul.f32 %v664, %v664
          %v667 = vmul.f32 %v663, %v665
          %v668 = vmul.f32 %v664, %v666
          %v669 = vmul.f32 %v667, 0.044715
          %v670 = vmul.f32 %v668, 0.044715
          %v671 = vadd.f32 %v663, %v669
          %v672 = vadd.f32 %v664, %v670
          %v673 = vmul.f32 %v671, 0.7978846
          %v674 = vmul.f32 %v672, 0.7978846
          %v675 = vtanh.pop %v673
          %v676 = vtanh.pop %v674
          %v677 = vadd.f32 %v675, 1.0
          %v678 = vadd.f32 %v676, 1.0
          %v679 = vmul.f32 %v677, 0.5
          %v680 = vmul.f32 %v678, 0.5
          %v681 = vmul.f32 %v663, %v679
          %v682 = vmul.f32 %v664, %v680
          %v683 = vpack.c.bf16 %v682, %v681
          %v684 = vld [vmem:[%s3] sm:$0xf]
          %v685 = vld [vmem:[%s3 + $0x4] sm:$0xf]
          %v686 = vld [vmem:[%s3 + $0x8] sm:$0xf]
          %v687 = vld [vmem:[%s3 + $0xc] sm:$0xf]
          %v688 = vld [vmem:[%s3 + $0x10] sm:$0xf]
          %v689 = vld [vmem:[%s3 + $0x14] sm:$0xf]
          %v690 = vld [vmem:[%s3 + $0x18] sm:$0xf]
          %v691 = vld [vmem:[%s3 + $0x1c] sm:$0xf]
          %v692 = vld [vmem:[%s3 + $0x20] sm:$0xf]
          %v693 = vld [vmem:[%s3 + $0x24] sm:$0xf]
          %v694 = vld [vmem:[%s3 + $0x28] sm:$0xf]
          %v695 = vld [vmem:[%s3 + $0x2c] sm:$0xf]
          %v696 = vld [vmem:[%s3 + $0x30] sm:$0xf]
          %v697 = vld [vmem:[%s3 + $0x34] sm:$0xf]
          %v698 = vld [vmem:[%s3 + $0x38] sm:$0xf]
          %v699 = vld [vmem:[%s3 + $0x3c] sm:$0xf]
          %v700 = vld [vmem:[%s4] sm:$0x1]
          %v702 = vperm.slane %v700, 0
          %v720 = vunpack.c.l.b16 %v684
          %v721 = vunpack.c.l.b16 %v685
          %v722 = vunpack.c.l.b16 %v686
          %v723 = vunpack.c.l.b16 %v687
          %v724 = vunpack.c.l.b16 %v688
          %v725 = vunpack.c.l.b16 %v689
          %v726 = vunpack.c.l.b16 %v690
          %v727 = vunpack.c.l.b16 %v691
          %v728 = vunpack.c.l.b16 %v692
          %v729 = vunpack.c.l.b16 %v693
          %v730 = vunpack.c.l.b16 %v694
          %v731 = vunpack.c.l.b16 %v695
          %v732 = vunpack.c.l.b16 %v696
          %v733 = vunpack.c.l.b16 %v697
          %v734 = vunpack.c.l.b16 %v698
          %v735 = vunpack.c.l.b16 %v699
          %v736 = vpack.c.b16 %v721, %v720
          %v737 = vpack.c.b16 %v723, %v722
          %v738 = vpack.c.b16 %v725, %v724
          %v739 = vpack.c.b16 %v727, %v726
          %v740 = vpack.c.b16 %v729, %v728
          %v741 = vpack.c.b16 %v731, %v730
          %v742 = vpack.c.b16 %v733, %v732
          %v743 = vpack.c.b16 %v735, %v734
          %752 = vmatpush.bf16.msra.mxu0 %v743
          %753 = vmatpush.bf16.msra.mxu0 %v742
          %754 = vmatpush.bf16.msra.mxu0 %v741
          %755 = vmatpush.bf16.msra.mxu0 %v740
          %756 = vmatpush.bf16.msra.mxu0 %v739
          %757 = vmatpush.bf16.msra.mxu0 %v738
          %758 = vmatpush.bf16.msra.mxu0 %v737
          %759 = vmatpush.bf16.msra.mxu0 %v736
          %760 = vmatmul.bf16.gmra.mxu0 %v683
          %v761 = vpop.f32.mrf.mxu0
          %v762 = vadd.f32 %v702, %v761
          %v763 = vpop.f32.mrf.mxu0
          %v764 = vadd.f32 %v702, %v763
          %765 = vdwg.mxu0
          %766 = vst [vmem:[#allocation7] sm:$0xff] %v762
          %767 = vst [vmem:[#allocation7 + $0x8] sm:$0xff] %v764
        $region75: #{_padded_forward.1} parent=58 // pred_fallthru
          _
        // Predicated region
        $region76: #{_padded_forward.1} parent=58 // pred_check
          %p768 = pneg %p167
        $region77: #{_padded_forward.1} parent=58 // pred_check_branch
          %770 = sbr.rel (%p768) target = $region79
        $region78: #{_padded_forward.1} parent=58 // pred_region
          %s771 = smul.u32 2, %s24
          %773 = vsyncadd [#allocation6], 0
          %s774 = smul.addr %s771, 8
          %s775 = scalar_lea.hbm %s5, %s774
          %s776 = sshll.u32 [#allocation7], 4
          %s777 = int_to_ptr.vmem [resolvable:$true] %s776
          %s778 = sshll.u32 %s775, 4
          %s779 = int_to_ptr.hbm [resolvable:$true] %s778
          %784 = dma.vmem_to_hbm [thread:$0]  %s777, 256, %s779, [#allocation6], 128, 128, 8
        $region79: #{_padded_forward.1} parent=58 // pred_fallthru
          _
        // Predicated region
        $region80: #{_padded_forward.1} parent=58 // pred_check
          %p785 = pneg %p167
        $region81: #{_padded_forward.1} parent=58 // pred_check_branch
          %787 = sbr.rel (%p785) target = $region83
        $region82: #{_padded_forward.1} parent=58 // pred_region
          %789 = dma.done [#allocation6], 256
        $region83: #{_padded_forward.1} parent=58 // pred_fallthru
          _
      $region59: #{_padded_forward.1} parent=5 // pred_fallthru
        _
      %p790 = scmp.le.s32.totalorder 2, %s15
      // Predicated region
      $region84: #{_padded_forward.1} parent=5 // pred_check
        %p791 = pneg %p790
      $region85: #{_padded_forward.1} parent=5 // pred_check_branch
        %793 = sbr.rel (%p791) target = $region87
      $region86: #{_padded_forward.1} parent=5 // pred_region
        %s794 = ssub.s32 %s15, 2
      $region87: #{_padded_forward.1} parent=5 // pred_fallthru
        _
    $region6: #{_padded_forward.1} parent=1 // loop_footer
      %s19 = sadd.s32 1, %s15
    $region7: #{_padded_forward.1} parent=1 // loop_footer_branch
      %14 = sbr.rel target = $region3
    $region8: #{_padded_forward.1} parent=1 // loop_exit
      _
    %795 = vsyncpa [#allocation5], 1
    %s796 = scalar_lea.sflag [#allocation5], 1
    %797 = vsyncpa %s796, 1
    %798 = vsyncpa [#allocation6], 1
    %s799 = scalar_lea.sflag [#allocation6], 1
    %800 = vsyncpa %s799, 1

</llo_original>
